<compile_context>
chip_gen: v6e
topology: v6e:2x2x1
jax: 0.10.0
libtpu: 0.0.40
codegen_flags: <defaults>
</compile_context>

<pallas_src>
import numpy as np
import jax
import jax.numpy as jnp
from jax.experimental import pallas as pl
from jax.experimental.pallas import tpu as pltpu


# ----------------------------------------------------------------------------
# Deterministic stand-in for `bbr_table` (black-body radiation RGB table).
# Uses the standard Tanner-Helland approximation; values in [0, 255].
# ----------------------------------------------------------------------------
class _BBRTable:
    min_temp = 1000
    max_temp = 40000

    @staticmethod
    def temp2rgb(temperature: int) -> np.ndarray:
        t = temperature / 100.0
        if t <= 66.0:
            r = 255.0
            g = 99.4708025861 * np.log(t) - 161.1195681661
            b = 0.0 if t <= 19.0 else (138.5177312231 * np.log(t - 10.0)
                                       - 305.0447927307)
        else:
            r = 329.698727446 * ((t - 60.0) ** -0.1332047592)
            g = 288.1221695283 * ((t - 60.0) ** -0.0755148492)
            b = 255.0
        return np.clip(np.array([r, g, b], dtype=np.float64), 0.0, 255.0)


bbr_table = _BBRTable()


# ----------------------------------------------------------------------------
# Pallas kernel: per-row (= per-channel) elementwise scale on a lane-dense
# flattened view of the image.
# ----------------------------------------------------------------------------
def _scale_rows_kernel(img_ref, scale_ref, out_ref):
    # img_ref / out_ref: (row_tile, col_tile) VMEM tile of the flattened image.
    # scale_ref:         (row_tile, 1) per-row channel scale; broadcasts over lanes.
    out_ref[...] = img_ref[...] * scale_ref[...]


# Tile sizing: lane tile a multiple of 128, sublane tile a multiple of 8,
# capped so each f32 buffer is <= 256 * 2048 * 4 B = 2 MiB. With double
# buffering of in + out (+ tiny scale) that is ~8 MiB of VMEM — safe on every
# generation (v5e 16 MiB / v6e 32 MiB / v7x 32 MiB default scoped limits).
_MAX_COL_TILE = 2048   # lanes
_MAX_ROW_TILE = 256    # sublanes


def _pick_tiles(rows: int, cols: int):
    # Full-extent blocks are always legal (even if not (8,128)-aligned);
    # otherwise use aligned, capped tiles and let the grid cdiv over them.
    col_tile = _MAX_COL_TILE if cols > _MAX_COL_TILE else cols
    row_tile = _MAX_ROW_TILE if rows > _MAX_ROW_TILE else rows
    return row_tile, col_tile


def adjust_color_temperature(image: jax.Array, rgb_scale: jax.Array) -> jax.Array:
    """image: (B, C, H, W) NCHW; rgb_scale: (C,) float scale per channel."""
    B, C, H, W = image.shape
    rows, cols = B * C, H * W

    # Lane-dense 2D view: row index = b*C + c, so channel of a row is row % C.
    flat = image.reshape(rows, cols)
    row_scale = jnp.tile(rgb_scale.astype(image.dtype), B).reshape(rows, 1)

    row_tile, col_tile = _pick_tiles(rows, cols)
    grid = (pl.cdiv(rows, row_tile), pl.cdiv(cols, col_tile))

    out_flat = pl.pallas_call(
        _scale_rows_kernel,
        out_shape=jax.ShapeDtypeStruct((rows, cols), image.dtype),
        grid=grid,
        in_specs=[
            pl.BlockSpec((row_tile, col_tile), lambda i, j: (i, j)),
            pl.BlockSpec((row_tile, 1), lambda i, j: (i, 0)),
        ],
        out_specs=pl.BlockSpec((row_tile, col_tile), lambda i, j: (i, j)),
        compiler_params=pltpu.CompilerParams(
            dimension_semantics=("parallel", "parallel")),
    )(flat, row_scale)

    return out_flat.reshape(B, C, H, W)


# ----------------------------------------------------------------------------
# Module-like wrapper (deterministic "random" temperature pick).
# ----------------------------------------------------------------------------
class AdjustColorTemperature:
    def __init__(self, temp_low: int = 2001, temp_high: int = 15000, seed: int = 0):
        self.temp_low = temp_low
        self.temp_high = temp_high
        self._rng = np.random.default_rng(seed)  # deterministic host RNG
        self.last_rgb_scale = None

    def __call__(self, image: jax.Array) -> jax.Array:
        # TODO(synk): for genuinely tiny images a plain-JAX broadcast multiply
        # would beat the kernel launch; kept on the Pallas path here so the
        # kernel is exercised.
        temperature = int(self._rng.integers(
            low=max(bbr_table.min_temp, self.temp_low),
            high=min(bbr_table.max_temp, self.temp_high)))
        rgb_temp = bbr_table.temp2rgb(temperature).astype(np.float64) / 255.0
        self.last_rgb_scale = rgb_temp
        rgb_scale = jnp.asarray(rgb_temp, dtype=jnp.float32)
        return adjust_color_temperature(image, rgb_scale)


if __name__ == "__main__":
    key = jax.random.PRNGKey(0)
    k1, k2 = jax.random.split(key)

    # Small demo shape (RGB batch, NCHW): flattens to (6, 256) -> single grid step.
    B, C, H, W = 2, 3, 16, 16
    image = jax.random.uniform(k1, (B, C, H, W), dtype=jnp.float32)

    mod = AdjustColorTemperature(temp_low=2001, temp_high=15000, seed=0)
    out = jax.block_until_ready(mod(image))

    scale = jnp.asarray(mod.last_rgb_scale, dtype=jnp.float32)
    ref = image * scale[None, :, None, None]
    assert jnp.allclose(out, ref, atol=1e-6, rtol=1e-6), "mismatch vs reference (small)"

    # Second check: cols = 4096 > 2048 -> multi-tile lane grid (2 lane tiles).
    B2, C2, H2, W2 = 2, 3, 64, 64
    image2 = jax.random.uniform(k2, (B2, C2, H2, W2), dtype=jnp.float32)
    out2 = jax.block_until_ready(adjust_color_temperature(image2, scale))
    ref2 = image2 * scale[None, :, None, None]
    assert jnp.allclose(out2, ref2, atol=1e-6, rtol=1e-6), "mismatch vs reference (tiled)"

    print("KERNEL_OK")
</pallas_src>

<mosaic_0001>
module attributes {stable_mosaic.version = 11 : i64} {
  func.func @_scale_rows_kernel(%arg0: i32, %arg1: i32, %arg2: memref<6x256xf32, #tpu.memory_space<vmem>>, %arg3: memref<6x1xf32, #tpu.memory_space<vmem>>, %arg4: memref<6x256xf32, #tpu.memory_space<vmem>>) attributes {dimension_semantics = [#tpu.dimension_semantics<parallel>, #tpu.dimension_semantics<parallel>], iteration_bounds = array<i64: 1, 1>, scalar_prefetch = 0 : i64, scratch_operands = 0 : i64, tpu.core_type = #tpu.core_type<tc>, window_params = [{transform_indices = @transform_0, window_bounds = array<i64: 6, 256>}, {transform_indices = @transform_1, window_bounds = array<i64: 6, 1>}, {transform_indices = @transform_2, window_bounds = array<i64: 6, 256>}]} {
    %c0 = arith.constant 0 : index
    %c0_0 = arith.constant 0 : index
    %0 = vector.load %arg2[%c0, %c0_0] : memref<6x256xf32, #tpu.memory_space<vmem>>, vector<6x256xf32>
    %c0_1 = arith.constant 0 : index
    %c0_2 = arith.constant 0 : index
    %1 = vector.load %arg3[%c0_1, %c0_2] : memref<6x1xf32, #tpu.memory_space<vmem>>, vector<6x1xf32>
    %2 = vector.broadcast %1 : vector<6x1xf32> to vector<6x256xf32>
    %3 = arith.mulf %0, %2 : vector<6x256xf32>
    %c0_3 = arith.constant 0 : index
    %c0_4 = arith.constant 0 : index
    %4 = vector.load %arg4[%c0_3, %c0_4] : memref<6x256xf32, #tpu.memory_space<vmem>>, vector<6x256xf32>
    tpu.vector_store %arg4[%c0_3, %c0_4], %3 {strides = array<i32>} : memref<6x256xf32, #tpu.memory_space<vmem>>, vector<6x256xf32>,
    return
  }
  func.func @transform_0(%arg0: i32, %arg1: i32) -> (i32, i32) {
    %c0_i32 = arith.constant 0 : i32
    return %arg0, %arg1 : i32, i32
  }
  func.func @transform_1(%arg0: i32, %arg1: i32) -> (i32, i32) {
    %c0_i32 = arith.constant 0 : i32
    %c0_i32_0 = arith.constant 0 : i32
    return %arg0, %c0_i32 : i32, i32
  }
  func.func @transform_2(%arg0: i32, %arg1: i32) -> (i32, i32) {
    %c0_i32 = arith.constant 0 : i32
    return %arg0, %arg1 : i32, i32
  }
}

</mosaic_0001>

<llo_original>
// kernel: tpu_custom_call.1
$region0: #{tpu_custom_call.1}
  #allocation0 [shape = 'u32[]', space=smem, size = 0x4, offset = 0x4, fixed_abs, tag = 'smem constant byte address 0x4 - core index']
  #allocation1 [shape = 'u32[144,128]{1,0:T(1,128)}', space=vmem, size = 0x12000, scoped, tag = 'internal scratch']
  %s0 = inlined_call_operand.hbm [shape: f32[6,256], index: 0, kind: input, shape index: {}]
  %s1 = inlined_call_operand.vmem [shape: f32[6,1], index: 1, kind: input, shape index: {}]
  %s2 = inlined_call_operand.hbm [shape: f32[6,256], index: 2, kind: output, shape index: {}]
  %s3 = sld [smem:[#allocation0]]
  $region22: #{tpu_custom_call.1} parent=0
    _
  %s5 = ssub.s32 1, %s3
  %s6 = scalar_select 0, %s5, %s3
  $region1: #{tpu_custom_call.1} parent=0
    #allocation2 [shape = 'u8[8192]{0}', space=vmem, size = 0x2000, scoped, tag = 'input window, operand 0, single buffered']
    #allocation3 [shape = 's32[1]{0}', space=sflag, size = 0x4, scoped, tag = 'scoped memory for tpu_custom_call.1']
    #allocation4 [shape = 's32[1]{0}', space=sflag, size = 0x4, scoped, tag = 'scoped memory for tpu_custom_call.1']
    #allocation5 [shape = 'u8[8192]{0}', space=vmem, size = 0x2000, scoped, tag = 'output window, operand 0, single buffered']
    %7 = vsyncpa [#allocation3], 0
    %8 = vsyncpa [#allocation4], 0
    // Predicated region
    $region2: #{tpu_custom_call.1} parent=1 // pred_check
      _
    $region3: #{tpu_custom_call.1} parent=1 // pred_check_branch
      %10 = sbr.rel (0) target = $region5
    $region4: #{tpu_custom_call.1} parent=1 // pred_region
      %s12 = ssub.s32 256, 256
      %13 = vsyncadd [#allocation3], %s12
      %s15 = sshll.u32 [#allocation2], 4
      %s16 = int_to_ptr.vmem [resolvable:$true] %s15
      %18 = dma.hbm_to_vmem [thread:$0]  %s0, 256, %s16, [#allocation3]
    $region5: #{tpu_custom_call.1} parent=1 // pred_fallthru
      _
    // Predicated region
    $region6: #{tpu_custom_call.1} parent=1 // pred_check
      _
    $region7: #{tpu_custom_call.1} parent=1 // pred_check_branch
      %20 = sbr.rel (0) target = $region9
    $region8: #{tpu_custom_call.1} parent=1 // pred_region
      _
    $region9: #{tpu_custom_call.1} parent=1 // pred_fallthru
      _
    // Predicated region
    $region10: #{tpu_custom_call.1} parent=1 // pred_check
      _
    $region11: #{tpu_custom_call.1} parent=1 // pred_check_branch
      %22 = sbr.rel (0) target = $region13
    $region12: #{tpu_custom_call.1} parent=1 // pred_region
      %23 = dma.done [#allocation3], 256
    $region13: #{tpu_custom_call.1} parent=1 // pred_fallthru
      _
    %v24 = vld [vmem:[#allocation2] sm:$0x3f]
    %v25 = vld [vmem:[#allocation2 + $0x8] sm:$0x3f]
    %v26 = vld [vmem:[%s1] sm:$0x3f]
    %28 = vset.pattern.permute.xlu0 0
    %29 = vperm.xlu0 %28, %v26
    %v30 = vpop.permute.xlu0 %29
    %v32 = vmul.f32 %v24, %v30
    %v33 = vmul.f32 %v25, %v30
    %34 = vst [vmem:[#allocation5] sm:$0x3f] %v32
    %35 = vst [vmem:[#allocation5 + $0x8] sm:$0x3f] %v33
    // Predicated region
    $region14: #{tpu_custom_call.1} parent=1 // pred_check
      _
    $region15: #{tpu_custom_call.1} parent=1 // pred_check_branch
      %37 = sbr.rel (0) target = $region17
    $region16: #{tpu_custom_call.1} parent=1 // pred_region
      %s39 = ssub.s32 256, 256
      %40 = vsyncadd [#allocation4], %s39
      %s42 = sshll.u32 [#allocation5], 4
      %s43 = int_to_ptr.vmem [resolvable:$true] %s42
      %45 = dma.vmem_to_hbm [thread:$0]  %s43, 256, %s2, [#allocation4]
    $region17: #{tpu_custom_call.1} parent=1 // pred_fallthru
      _
    // Predicated region
    $region18: #{tpu_custom_call.1} parent=1 // pred_check
      _
    $region19: #{tpu_custom_call.1} parent=1 // pred_check_branch
      %47 = sbr.rel (0) target = $region21
    $region20: #{tpu_custom_call.1} parent=1 // pred_region
      %48 = dma.done [#allocation4], 256
    $region21: #{tpu_custom_call.1} parent=1 // pred_fallthru
      _
    %49 = vsyncpa [#allocation3], 1
    %50 = vsyncpa [#allocation4], 1

</llo_original>
